<compile_context>
chip_gen: v7x
topology: tpu7x:2x2x1
jax: 0.10.0
libtpu: 0.0.40
codegen_flags: <defaults>
</compile_context>

<pallas_src>
import jax
import jax.numpy as jnp
from jax.experimental import pallas as pl
from jax.experimental.pallas import tpu as pltpu


def _make_kernel(beta: float):
    half_beta = 0.5 * float(beta)

    def kernel(slope_ref, x_ref, o_ref):
        slope = slope_ref[...]                      # (F, 1) f32, VMEM-resident
        x = x_ref[...].astype(jnp.float32)          # (bk, F, T) compute in f32
        z = slope[None, :, :] * x                   # broadcast over batch & lanes
        # sigmoid(z) == 0.5*tanh(0.5*z) + 0.5  (EUP slot, stable, no divide);
        # beta folded in:  beta*sigmoid(z) = half_beta*tanh(0.5*z) + half_beta.
        o_ref[...] = (half_beta * jnp.tanh(0.5 * z) + half_beta).astype(o_ref.dtype)

    return kernel


def _tpu_tuning():
    """Return (target_block_bytes, min_grid_steps) for the local TPU generation."""
    kind = ""
    try:
        kind = jax.devices()[0].device_kind.lower()
    except Exception:  # CPU interpret / unknown backend: fall through to defaults
        pass
    if "v7" in kind or "7x" in kind:
        # 2 TensorCores, 64 MiB VMEM, 3.2 TB/s: ~8 MiB blocks, >= 4 steps so each
        # core gets >= 2 steps and keeps double-buffer overlap.
        return 8 << 20, 4
    # v5e / v6e: single TensorCore, 128 MiB VMEM -> biggest block that fits,
    # no point splitting the grid for "parallelism".
    return 16 << 20, 1


def _choose_batch_tile(batch: int, per_batch_bytes: int,
                       target_bytes: int, min_grid_steps: int) -> int:
    bk = max(1, target_bytes // max(per_batch_bytes, 1))
    bk = min(bk, batch)
    if min_grid_steps > 1 and batch >= min_grid_steps:
        bk = min(bk, max(1, batch // min_grid_steps))
    return bk


def learnable_sigmoid_2d(x: jax.Array, slope: jax.Array, beta: float = 1.0,
                         *, donate_x: bool = False) -> jax.Array:
    """x: (B, F, T); slope: (F, 1) or (F,). Returns beta * sigmoid(slope * x)."""
    B, F, T = x.shape
    slope = jnp.asarray(slope, jnp.float32).reshape(F, 1)  # defensive reshape

    # Lane-dense output blocks: pad T up to a multiple of 128 (sliced back below).
    T_pad = ((T + 127) // 128) * 128
    x_p = x if T_pad == T else jnp.pad(x, ((0, 0), (0, 0), (0, T_pad - T)))

    itemsize = x.dtype.itemsize
    per_batch_bytes = F * T_pad * itemsize
    target_bytes, min_steps = _tpu_tuning()
    bk = _choose_batch_tile(B, per_batch_bytes, target_bytes, min_steps)
    grid = (pl.cdiv(B, bk),)

    # VMEM budget: double-buffered x in + out tiles, resident (lane-padded)
    # slope, plus a little slack for compiler-internal scratch.
    tile_bytes = bk * F * T_pad * itemsize
    slope_bytes = F * 128 * 4
    vmem_limit = 2 * (tile_bytes + tile_bytes) + 2 * slope_bytes + (2 << 20)
    vmem_limit = int(min(max(vmem_limit, 4 << 20), 100 << 20))

    cost = pl.CostEstimate(
        flops=4 * B * F * T,
        transcendentals=B * F * T,
        bytes_accessed=2 * B * F * T_pad * itemsize + F * 4,
    )

    io_aliases = {1: 0} if (donate_x and T_pad == T) else {}

    out = pl.pallas_call(
        _make_kernel(beta),
        out_shape=jax.ShapeDtypeStruct((B, F, T_pad), x.dtype),
        grid=grid,
        in_specs=[
            pl.BlockSpec((F, 1), lambda i: (0, 0)),            # slope: resident
            pl.BlockSpec((bk, F, T_pad), lambda i: (i, 0, 0)),  # x batch chunk
        ],
        out_specs=pl.BlockSpec((bk, F, T_pad), lambda i: (i, 0, 0)),
        compiler_params=pltpu.CompilerParams(
            dimension_semantics=("parallel",),
            vmem_limit_bytes=vmem_limit,
        ),
        cost_estimate=cost,
        input_output_aliases=io_aliases,
    )(slope, x_p)

    return out if T_pad == T else out[..., :T]


if __name__ == "__main__":
    key = jax.random.PRNGKey(0)
    k_x, k_s = jax.random.split(key)

    B, F, T = 2, 16, 128          # batch, in_features, frames
    beta = 2.0

    x = jax.random.normal(k_x, (B, F, T), dtype=jnp.float32)
    # The module initializes slope to ones; perturb it so the per-feature
    # broadcast path is actually exercised.
    slope = 1.0 + 0.1 * jax.random.normal(k_s, (F, 1), dtype=jnp.float32)

    out = jax.block_until_ready(learnable_sigmoid_2d(x, slope, beta=beta))

    # Reference: same math as the PyTorch forward.
    ref = beta * jax.nn.sigmoid(slope[None, :, :] * x)
    assert out.shape == ref.shape
    assert out.dtype == x.dtype
    assert jnp.allclose(out, ref, atol=1e-6, rtol=1e-5), float(
        jnp.max(jnp.abs(out - ref))
    )

    print("KERNEL_OK")
</pallas_src>

<mosaic_0001>
module attributes {stable_mosaic.version = 11 : i64} {
  func.func @kernel(%arg0: i32, %arg1: memref<16x1xf32, #tpu.memory_space<vmem>>, %arg2: memref<2x16x128xf32, #tpu.memory_space<vmem>>, %arg3: memref<2x16x128xf32, #tpu.memory_space<vmem>>) attributes {dimension_semantics = [#tpu.dimension_semantics<parallel>], iteration_bounds = array<i64: 1>, scalar_prefetch = 0 : i64, scratch_operands = 0 : i64, tpu.core_type = #tpu.core_type<tc>, window_params = [{pipeline_mode = #tpu.pipeline_mode<synchronous>, transform_indices = @transform_0, window_bounds = array<i64: 16, 1>}, {transform_indices = @transform_1, window_bounds = array<i64: 2, 16, 128>}, {transform_indices = @transform_2, window_bounds = array<i64: 2, 16, 128>}]} {
    %c0 = arith.constant 0 : index
    %c0_0 = arith.constant 0 : index
    %0 = vector.load %arg1[%c0, %c0_0] : memref<16x1xf32, #tpu.memory_space<vmem>>, vector<16x1xf32>
    %c0_1 = arith.constant 0 : index
    %c0_2 = arith.constant 0 : index
    %c0_3 = arith.constant 0 : index
    %1 = vector.load %arg2[%c0_1, %c0_2, %c0_3] : memref<2x16x128xf32, #tpu.memory_space<vmem>>, vector<2x16x128xf32>
    %2 = vector.shape_cast %0 : vector<16x1xf32> to vector<1x16x1xf32>
    %3 = vector.broadcast %2 : vector<1x16x1xf32> to vector<2x16x128xf32>
    %4 = arith.mulf %3, %1 : vector<2x16x128xf32>
    %cst = arith.constant 5.000000e-01 : f32
    %5 = vector.broadcast %cst : f32 to vector<2x16x128xf32>
    %6 = arith.mulf %5, %4 : vector<2x16x128xf32>
    %7 = math.tanh %6 : vector<2x16x128xf32>
    %cst_4 = arith.constant 1.000000e+00 : f32
    %8 = vector.broadcast %cst_4 : f32 to vector<2x16x128xf32>
    %9 = arith.mulf %8, %7 : vector<2x16x128xf32>
    %cst_5 = arith.constant 1.000000e+00 : f32
    %10 = vector.broadcast %cst_5 : f32 to vector<2x16x128xf32>
    %11 = arith.addf %9, %10 : vector<2x16x128xf32>
    %c0_6 = arith.constant 0 : index
    %c0_7 = arith.constant 0 : index
    %c0_8 = arith.constant 0 : index
    %12 = vector.load %arg3[%c0_6, %c0_7, %c0_8] : memref<2x16x128xf32, #tpu.memory_space<vmem>>, vector<2x16x128xf32>
    tpu.vector_store %arg3[%c0_6, %c0_7, %c0_8], %11 {strides = array<i32>} : memref<2x16x128xf32, #tpu.memory_space<vmem>>, vector<2x16x128xf32>,
    return
  }
  func.func @transform_0(%arg0: i32) -> (i32, i32) {
    %c0_i32 = arith.constant 0 : i32
    %c0_i32_0 = arith.constant 0 : i32
    %c0_i32_1 = arith.constant 0 : i32
    return %c0_i32, %c0_i32_0 : i32, i32
  }
  func.func @transform_1(%arg0: i32) -> (i32, i32, i32) {
    %c0_i32 = arith.constant 0 : i32
    %c0_i32_0 = arith.constant 0 : i32
    %c0_i32_1 = arith.constant 0 : i32
    return %arg0, %c0_i32, %c0_i32_0 : i32, i32, i32
  }
  func.func @transform_2(%arg0: i32) -> (i32, i32, i32) {
    %c0_i32 = arith.constant 0 : i32
    %c0_i32_0 = arith.constant 0 : i32
    %c0_i32_1 = arith.constant 0 : i32
    return %arg0, %c0_i32, %c0_i32_0 : i32, i32, i32
  }
}

</mosaic_0001>

<llo_original>
// kernel: tpu_custom_call.1
$region0: #{tpu_custom_call.1}
  #allocation0 [shape = 'u32[]', space=smem, size = 0x4, offset = 0x4, fixed_abs, tag = 'smem constant byte address 0x4 - core index']
  #allocation1 [shape = 'u32[144,128]{1,0:T(1,128)}', space=vmem, size = 0x12000, scoped, tag = 'internal scratch']
  %s0 = inlined_call_operand.vmem [shape: f32[16,1], index: 0, kind: input, shape index: {}]
  %s1 = inlined_call_operand.hbm [shape: f32[2,16,128], index: 1, kind: input, shape index: {}]
  %s2 = inlined_call_operand.hbm [shape: f32[2,16,128], index: 2, kind: output, shape index: {}]
  %s3 = sld [smem:[#allocation0]]
  $region22: #{tpu_custom_call.1} parent=0
    _
  %s5 = ssub.s32 1, %s3
  %s6 = scalar_select 0, %s5, %s3
  $region1: #{tpu_custom_call.1} parent=0
    #allocation2 [shape = 'u8[16384]{0}', space=vmem, size = 0x4000, scoped, tag = 'input window, operand 1, single buffered']
    #allocation3 [shape = 's32[1]{0}', space=sflag, size = 0x4, scoped, tag = 'scoped memory for tpu_custom_call.1']
    #allocation4 [shape = 's32[1]{0}', space=sflag, size = 0x4, scoped, tag = 'scoped memory for tpu_custom_call.1']
    #allocation5 [shape = 'u8[16384]{0}', space=vmem, size = 0x4000, scoped, tag = 'output window, operand 0, single buffered']
    %7 = vsyncpa [#allocation3], 0
    %8 = vsyncpa [#allocation4], 0
    // Predicated region
    $region2: #{tpu_custom_call.1} parent=1 // pred_check
      _
    $region3: #{tpu_custom_call.1} parent=1 // pred_check_branch
      %10 = sbr.rel (0) target = $region5
    $region4: #{tpu_custom_call.1} parent=1 // pred_region
      _
    $region5: #{tpu_custom_call.1} parent=1 // pred_fallthru
      _
    // Predicated region
    $region6: #{tpu_custom_call.1} parent=1 // pred_check
      _
    $region7: #{tpu_custom_call.1} parent=1 // pred_check_branch
      %12 = sbr.rel (0) target = $region9
    $region8: #{tpu_custom_call.1} parent=1 // pred_region
      %s14 = ssub.s32 512, 512
      %15 = vsyncadd [#allocation3], %s14
      %s16 = sshll.u32 [#allocation2], 4
      %s17 = int_to_ptr.vmem [resolvable:$true] %s16
      %22 = dma.hbm_to_vmem [thread:$0]  %s1, 512, %s17, [#allocation3], 128, 128, 8
    $region9: #{tpu_custom_call.1} parent=1 // pred_fallthru
      _
    // Predicated region
    $region10: #{tpu_custom_call.1} parent=1 // pred_check
      _
    $region11: #{tpu_custom_call.1} parent=1 // pred_check_branch
      %24 = sbr.rel (0) target = $region13
    $region12: #{tpu_custom_call.1} parent=1 // pred_region
      %25 = dma.done [#allocation3], 512
    $region13: #{tpu_custom_call.1} parent=1 // pred_fallthru
      _
    %v26 = vld [vmem:[%s0] sm:$0xff]
    %v27 = vld [vmem:[%s0 + $0x8] sm:$0xff]
    %v28 = vld [vmem:[#allocation2] sm:$0xff]
    %v29 = vld [vmem:[#allocation2 + $0x8] sm:$0xff]
    %v30 = vld [vmem:[#allocation2 + $0x10] sm:$0xff]
    %v31 = vld [vmem:[#allocation2 + $0x18] sm:$0xff]
    %33 = vset.pattern.permute.xlu0 0
    %34 = vperm.xlu0 %33, %v26
    %v35 = vpop.permute.xlu0 %34
    %38 = vset.pattern.permute.xlu0 0
    %39 = vperm.xlu0 %38, %v27
    %v40 = vpop.permute.xlu0 %39
    %v42 = vmul.f32 %v35, %v28
    %v43 = vmul.f32 %v40, %v29
    %v44 = vmul.f32 %v35, %v30
    %v45 = vmul.f32 %v40, %v31
    %v46 = vmul.f32 %v42, 0.5
    %v47 = vmul.f32 %v43, 0.5
    %v48 = vmul.f32 %v44, 0.5
    %v49 = vmul.f32 %v45, 0.5
    %v50 = vtanh.pop %v46
    %v51 = vtanh.pop %v47
    %v52 = vtanh.pop %v48
    %v53 = vtanh.pop %v49
    %v54 = vadd.f32 %v50, 1.0
    %v55 = vadd.f32 %v51, 1.0
    %v56 = vadd.f32 %v52, 1.0
    %v57 = vadd.f32 %v53, 1.0
    %58 = vst [vmem:[#allocation5] sm:$0xff] %v54
    %59 = vst [vmem:[#allocation5 + $0x8] sm:$0xff] %v55
    %60 = vst [vmem:[#allocation5 + $0x10] sm:$0xff] %v56
    %61 = vst [vmem:[#allocation5 + $0x18] sm:$0xff] %v57
    // Predicated region
    $region14: #{tpu_custom_call.1} parent=1 // pred_check
      _
    $region15: #{tpu_custom_call.1} parent=1 // pred_check_branch
      %63 = sbr.rel (0) target = $region17
    $region16: #{tpu_custom_call.1} parent=1 // pred_region
      %s65 = ssub.s32 512, 512
      %66 = vsyncadd [#allocation4], %s65
      %s67 = sshll.u32 [#allocation5], 4
      %s68 = int_to_ptr.vmem [resolvable:$true] %s67
      %73 = dma.vmem_to_hbm [thread:$0]  %s68, 512, %s2, [#allocation4], 128, 128, 8
    $region17: #{tpu_custom_call.1} parent=1 // pred_fallthru
      _
    // Predicated region
    $region18: #{tpu_custom_call.1} parent=1 // pred_check
      _
    $region19: #{tpu_custom_call.1} parent=1 // pred_check_branch
      %75 = sbr.rel (0) target = $region21
    $region20: #{tpu_custom_call.1} parent=1 // pred_region
      %76 = dma.done [#allocation4], 512
    $region21: #{tpu_custom_call.1} parent=1 // pred_fallthru
      _
    %77 = vsyncpa [#allocation3], 1
    %78 = vsyncpa [#allocation4], 1

</llo_original>
